<compile_context>
chip_gen: v6e
topology: v6e:2x2x1
jax: 0.10.0
libtpu: 0.0.40
codegen_flags: <defaults>
</compile_context>

<pallas_src>
import jax
import jax.numpy as jnp
from jax.experimental import pallas as pl
from jax.experimental.pallas import tpu as pltpu


_LANES = 128


def _round_up(x, m):
    return (x + m - 1) // m * m


# ----------------------------- Pallas kernel ---------------------------------

def _kimcnn_fused_kernel(x_ref, wconv_ref, biasmask_ref, wlin_ref, blin_ref, out_ref):
    """Fused KimCNN forward for one batch tile.

    x_ref:        (TB, S, K)   bf16 windowed embeddings, K = max_win * D (=128)
    wconv_ref:    (K, NFp)     bf16 packed conv weights (zero-padded columns)
    biasmask_ref: (S, NFp)     f32  conv bias with validity mask folded in
    wlin_ref:     (NFp, Up)    bf16 linear weight (zero-padded)
    blin_ref:     (1, Up)      f32  linear bias (zero-padded)
    out_ref:      (TB, Up)     f32
    """
    TB, S, K = x_ref.shape
    NFp = wconv_ref.shape[1]

    # All three convolutions in ONE tall-M MXU matmul (M = TB*S, K = 128).
    x2 = x_ref[...].reshape(TB * S, K)
    conv = jnp.dot(x2, wconv_ref[...], preferred_element_type=jnp.float32)
    conv = conv.reshape(TB, S, NFp)

    # Bias + validity mask + ReLU (masked rows -> exactly 0; valid rows >= 0),
    # then global max-pool over positions.  Matches Conv2d(no pad)+ReLU+max_pool1d.
    conv = jnp.maximum(conv + biasmask_ref[...], 0.0)
    feats = jnp.max(conv, axis=1)                                   # (TB, NFp) f32

    # Final linear layer (dropout == identity at inference).
    out_ref[...] = (
        jnp.dot(feats.astype(wlin_ref.dtype), wlin_ref[...],
                preferred_element_type=jnp.float32)
        + blin_ref[...]
    )


def _pick_batch_tile(B, S, K, NFp, Up):
    """Largest batch tile whose working set fits comfortably in scoped VMEM."""
    try:
        vmem_cap = pltpu.get_tpu_info().vmem_capacity_bytes
    except Exception:
        vmem_cap = 64 * 1024 * 1024                     # conservative (v7x)
    budget = max(2 * 1024 * 1024, min(vmem_cap // 4, 24 * 1024 * 1024))
    # Per batch row: double-buffered bf16 X tile + f32 conv intermediate + out.
    per_row = 2 * S * K * 2 + S * NFp * 4 + Up * 4
    tb = max(1, int(budget // per_row))
    if tb >= B:
        return B
    return max(8, (tb // 8) * 8)     # keep (TB, Upad) output block sublane-aligned


def _kimcnn_pallas(x, wconv, biasmask, wlin, blin):
    B, S, K = x.shape
    NFp = wconv.shape[1]
    Up = wlin.shape[1]

    TB = _pick_batch_tile(B, S, K, NFp, Up)
    grid = (pl.cdiv(B, TB),)

    flops = 2 * B * S * K * NFp + 2 * B * NFp * Up
    bytes_accessed = sum(int(a.size) * a.dtype.itemsize
                         for a in (x, wconv, biasmask, wlin, blin)) + B * Up * 4

    return pl.pallas_call(
        _kimcnn_fused_kernel,
        out_shape=jax.ShapeDtypeStruct((B, Up), jnp.float32),
        grid=grid,
        in_specs=[
            pl.BlockSpec((TB, S, K), lambda i: (i, 0, 0)),   # X: batch-tiled
            pl.BlockSpec((K, NFp), lambda i: (0, 0)),        # conv weights: resident
            pl.BlockSpec((S, NFp), lambda i: (0, 0)),        # bias+mask: resident
            pl.BlockSpec((NFp, Up), lambda i: (0, 0)),       # linear weight: resident
            pl.BlockSpec((1, Up), lambda i: (0, 0)),         # linear bias: resident
        ],
        out_specs=pl.BlockSpec((TB, Up), lambda i: (i, 0)),  # lane-dense (Up = 128k)
        compiler_params=pltpu.CompilerParams(
            dimension_semantics=("parallel",),
            vmem_limit_bytes=32 * 1024 * 1024,
        ),
        cost_estimate=pl.CostEstimate(flops=int(flops), transcendentals=0,
                                      bytes_accessed=int(bytes_accessed)),
    )(x, wconv, biasmask, wlin, blin)


# ------------------------------ Model wrapper ---------------------------------

def init_params(key, vocab_size, utt_size, embedding_dim, window_sizes, feature_maps):
    keys = jax.random.split(key, 3 + 2 * len(window_sizes))
    # Embedding table, padding_idx=0 -> row 0 is zeros.
    emb_table = jax.random.normal(keys[0], (vocab_size, embedding_dim), jnp.float32) * 0.1
    emb_table = emb_table.at[0].set(0.0)

    conv_ws, conv_bs = [], []
    for i, win in enumerate(window_sizes):
        # PyTorch Conv2d weight is (F, 1, win, D); stored here as (win, D, F).
        w = jax.random.normal(keys[1 + 2 * i], (win, embedding_dim, feature_maps), jnp.float32) * 0.1
        b = jax.random.normal(keys[2 + 2 * i], (1, feature_maps), jnp.float32) * 0.1
        conv_ws.append(w)
        conv_bs.append(b)

    k_in = len(window_sizes) * feature_maps
    lin_w = jax.random.normal(keys[-2], (k_in, utt_size), jnp.float32) * 0.1
    lin_b = jax.random.normal(keys[-1], (1, utt_size), jnp.float32) * 0.1
    return dict(
        emb_table=emb_table, conv_ws=conv_ws, conv_bs=conv_bs,
        lin_w=lin_w, lin_b=lin_b, window_sizes=tuple(window_sizes),
    )


def kimcnn_forward(params, token_ids):
    window_sizes = params["window_sizes"]
    max_win = max(window_sizes)
    emb_table = params["emb_table"]
    D = emb_table.shape[1]
    F = params["conv_ws"][0].shape[-1]
    B, S = token_ids.shape
    NF = len(window_sizes) * F
    U = params["lin_w"].shape[1]
    K = max_win * D
    NFp = _round_up(NF, _LANES)
    Up = _round_up(U, _LANES)

    # --- host glue: windowed embedding gather -> X (B, S, max_win*D), bf16 ----
    # X[b, l, r*D:(r+1)*D] = emb_table[token_ids[b, min(l+r, S-1)]]
    # (clamped positions only ever hit zero-padded weight rows or masked pool
    #  positions, so they never affect the result)
    emb_bf16 = emb_table.astype(jnp.bfloat16)
    pos = jnp.minimum(jnp.arange(S)[:, None] + jnp.arange(max_win)[None, :], S - 1)
    win_ids = token_ids[:, pos]                                        # (B, S, max_win)
    x = jnp.take(emb_bf16, win_ids.reshape(-1), axis=0)                # (B*S*max_win, D) bf16
    x = x.reshape(B, S, K)

    # --- host glue: pack conv weights into one (K, NFp) bf16 matrix -----------
    wblocks = []
    for w in params["conv_ws"]:
        win = w.shape[0]
        wp = jnp.zeros((max_win, D, F), jnp.float32).at[:win].set(w)
        wblocks.append(wp.reshape(K, F))
    wconv = jnp.concatenate(wblocks, axis=1)                           # (K, NF)
    wconv = jnp.pad(wconv, ((0, 0), (0, NFp - NF))).astype(jnp.bfloat16)

    # --- host glue: fold additive validity mask into the conv bias ------------
    # Window j is valid at positions l <= S - w_j.  Exactness relies on the
    # in-kernel ReLU (see module docstring).
    bconv = jnp.concatenate(params["conv_bs"], axis=1)                 # (1, NF)
    rows = jnp.arange(S)[:, None]                                      # (S, 1)
    last_valid = jnp.repeat(
        jnp.array([S - w for w in window_sizes], jnp.int32), F)        # (NF,)
    mask = jnp.where(rows <= last_valid[None, :], 0.0, -1e30)          # (S, NF)
    biasmask = jnp.pad((bconv + mask).astype(jnp.float32),
                       ((0, 0), (0, NFp - NF)))                        # (S, NFp)

    # --- host glue: pad linear layer to 128 lanes ------------------------------
    wlin = jnp.pad(params["lin_w"], ((0, NFp - NF), (0, Up - U))).astype(jnp.bfloat16)
    blin = jnp.pad(params["lin_b"], ((0, 0), (0, Up - U))).astype(jnp.float32)

    out = _kimcnn_pallas(x, wconv, biasmask, wlin, blin)               # (B, Up)
    return out[:, :U]


def kimcnn_reference(params, token_ids):
    """Pure-JAX f32 reference mirroring the PyTorch module (eval mode)."""
    emb = jnp.take(params["emb_table"], token_ids, axis=0).astype(jnp.float32)
    B, S, D = emb.shape
    pooled = []
    for win, w, b in zip(params["window_sizes"], params["conv_ws"], params["conv_bs"]):
        L = S - win + 1
        acc = jnp.zeros((B, L, w.shape[-1]), jnp.float32)
        for r in range(win):
            acc = acc + jnp.einsum("bld,df->blf", emb[:, r:r + L, :], w[r])
        acc = jnp.maximum(acc + b, 0.0)
        pooled.append(jnp.max(acc, axis=1))
    feats = jnp.concatenate(pooled, axis=1)
    return feats @ params["lin_w"] + params["lin_b"]


# ----------------------------------- main -------------------------------------

if __name__ == "__main__":
    vocab_size = 50
    utt_size = 16
    embedding_dim = 32
    window_sizes = (2, 3, 4)
    feature_maps = 8
    batch = 2
    seq_len = 16

    key = jax.random.PRNGKey(0)
    pkey, xkey = jax.random.split(key)
    params = init_params(pkey, vocab_size, utt_size, embedding_dim,
                         window_sizes, feature_maps)

    # Token ids, including some padding (0) positions.
    token_ids = jax.random.randint(xkey, (batch, seq_len), 0, vocab_size, dtype=jnp.int32)

    out = kimcnn_forward(params, token_ids)
    out = jax.block_until_ready(out)

    ref = kimcnn_reference(params, token_ids)
    assert out.shape == (batch, utt_size), out.shape
    # bf16 operands with f32 accumulation -> relaxed tolerance vs the f32 reference.
    assert jnp.allclose(out, ref, atol=2e-2, rtol=2e-2), "mismatch vs reference"

    print("KERNEL_OK")
</pallas_src>

<mosaic_0001>
module attributes {stable_mosaic.version = 11 : i64} {
  func.func @_kimcnn_fused_kernel(%arg0: i32, %arg1: memref<2x16x128xbf16, #tpu.memory_space<vmem>>, %arg2: memref<128x128xbf16, #tpu.memory_space<vmem>>, %arg3: memref<16x128xf32, #tpu.memory_space<vmem>>, %arg4: memref<128x128xbf16, #tpu.memory_space<vmem>>, %arg5: memref<1x128xf32, #tpu.memory_space<vmem>>, %arg6: memref<2x128xf32, #tpu.memory_space<vmem>>) attributes {dimension_semantics = [#tpu.dimension_semantics<parallel>], iteration_bounds = array<i64: 1>, scalar_prefetch = 0 : i64, scratch_operands = 0 : i64, tpu.core_type = #tpu.core_type<tc>, window_params = [{transform_indices = @transform_0, window_bounds = array<i64: 2, 16, 128>}, {pipeline_mode = #tpu.pipeline_mode<synchronous>, transform_indices = @transform_1, window_bounds = array<i64: 128, 128>}, {pipeline_mode = #tpu.pipeline_mode<synchronous>, transform_indices = @transform_2, window_bounds = array<i64: 16, 128>}, {pipeline_mode = #tpu.pipeline_mode<synchronous>, transform_indices = @transform_3, window_bounds = array<i64: 128, 128>}, {pipeline_mode = #tpu.pipeline_mode<synchronous>, transform_indices = @transform_4, window_bounds = array<i64: 1, 128>}, {transform_indices = @transform_5, window_bounds = array<i64: 2, 128>}]} {
    %c0 = arith.constant 0 : index
    %c0_0 = arith.constant 0 : index
    %c0_1 = arith.constant 0 : index
    %0 = vector.load %arg1[%c0, %c0_0, %c0_1] : memref<2x16x128xbf16, #tpu.memory_space<vmem>>, vector<2x16x128xbf16>
    %1 = vector.shape_cast %0 : vector<2x16x128xbf16> to vector<32x128xbf16>
    %c0_2 = arith.constant 0 : index
    %c0_3 = arith.constant 0 : index
    %2 = vector.load %arg2[%c0_2, %c0_3] : memref<128x128xbf16, #tpu.memory_space<vmem>>, vector<128x128xbf16>
    %cst = arith.constant dense<0.000000e+00> : vector<32x128xf32>
    %3 = tpu.matmul %1, %2, %cst {dimension_numbers = #tpu.dot_dimension_numbers<[1], [0], [0], [1], [0, 0, 1, 1], [], []>} : vector<32x128xbf16>, vector<128x128xbf16>, vector<32x128xf32> -> vector<32x128xf32>
    %4 = vector.shape_cast %3 : vector<32x128xf32> to vector<2x16x128xf32>
    %c0_4 = arith.constant 0 : index
    %c0_5 = arith.constant 0 : index
    %5 = vector.load %arg3[%c0_4, %c0_5] : memref<16x128xf32, #tpu.memory_space<vmem>>, vector<16x128xf32>
    %6 = vector.shape_cast %5 : vector<16x128xf32> to vector<1x16x128xf32>
    %7 = vector.broadcast %6 : vector<1x16x128xf32> to vector<2x16x128xf32>
    %8 = arith.addf %4, %7 : vector<2x16x128xf32>
    %cst_6 = arith.constant 0.000000e+00 : f32
    %9 = vector.broadcast %cst_6 : f32 to vector<2x16x128xf32>
    %10 = arith.maximumf %8, %9 : vector<2x16x128xf32>
    %cst_7 = arith.constant dense<0xFF800000> : vector<2x128xf32>
    %11 = vector.multi_reduction <maximumf>, %10, %cst_7 [1] : vector<2x16x128xf32> to vector<2x128xf32>
    %12 = arith.truncf %11 : vector<2x128xf32> to vector<2x128xbf16>
    %c0_8 = arith.constant 0 : index
    %c0_9 = arith.constant 0 : index
    %13 = vector.load %arg4[%c0_8, %c0_9] : memref<128x128xbf16, #tpu.memory_space<vmem>>, vector<128x128xbf16>
    %cst_10 = arith.constant dense<0.000000e+00> : vector<2x128xf32>
    %14 = tpu.matmul %12, %13, %cst_10 {dimension_numbers = #tpu.dot_dimension_numbers<[1], [0], [0], [1], [0, 0, 1, 1], [], []>} : vector<2x128xbf16>, vector<128x128xbf16>, vector<2x128xf32> -> vector<2x128xf32>
    %c0_11 = arith.constant 0 : index
    %c0_12 = arith.constant 0 : index
    %15 = vector.load %arg5[%c0_11, %c0_12] : memref<1x128xf32, #tpu.memory_space<vmem>>, vector<1x128xf32>
    %16 = vector.broadcast %15 : vector<1x128xf32> to vector<2x128xf32>
    %17 = arith.addf %14, %16 : vector<2x128xf32>
    %c0_13 = arith.constant 0 : index
    %c0_14 = arith.constant 0 : index
    %18 = vector.load %arg6[%c0_13, %c0_14] : memref<2x128xf32, #tpu.memory_space<vmem>>, vector<2x128xf32>
    tpu.vector_store %arg6[%c0_13, %c0_14], %17 {strides = array<i32>} : memref<2x128xf32, #tpu.memory_space<vmem>>, vector<2x128xf32>,
    return
  }
  func.func @transform_0(%arg0: i32) -> (i32, i32, i32) {
    %c0_i32 = arith.constant 0 : i32
    %c0_i32_0 = arith.constant 0 : i32
    %c0_i32_1 = arith.constant 0 : i32
    return %arg0, %c0_i32, %c0_i32_0 : i32, i32, i32
  }
  func.func @transform_1(%arg0: i32) -> (i32, i32) {
    %c0_i32 = arith.constant 0 : i32
    %c0_i32_0 = arith.constant 0 : i32
    %c0_i32_1 = arith.constant 0 : i32
    return %c0_i32, %c0_i32_0 : i32, i32
  }
  func.func @transform_2(%arg0: i32) -> (i32, i32) {
    %c0_i32 = arith.constant 0 : i32
    %c0_i32_0 = arith.constant 0 : i32
    %c0_i32_1 = arith.constant 0 : i32
    return %c0_i32, %c0_i32_0 : i32, i32
  }
  func.func @transform_3(%arg0: i32) -> (i32, i32) {
    %c0_i32 = arith.constant 0 : i32
    %c0_i32_0 = arith.constant 0 : i32
    %c0_i32_1 = arith.constant 0 : i32
    return %c0_i32, %c0_i32_0 : i32, i32
  }
  func.func @transform_4(%arg0: i32) -> (i32, i32) {
    %c0_i32 = arith.constant 0 : i32
    %c0_i32_0 = arith.constant 0 : i32
    %c0_i32_1 = arith.constant 0 : i32
    return %c0_i32, %c0_i32_0 : i32, i32
  }
  func.func @transform_5(%arg0: i32) -> (i32, i32) {
    %c0_i32 = arith.constant 0 : i32
    %c0_i32_0 = arith.constant 0 : i32
    return %arg0, %c0_i32 : i32, i32
  }
}

</mosaic_0001>

<llo_original>
// kernel: tpu_custom_call.1
$region0: #{tpu_custom_call.1}
  #allocation0 [shape = 'u32[]', space=smem, size = 0x4, offset = 0x4, fixed_abs, tag = 'smem constant byte address 0x4 - core index']
  #allocation1 [shape = 'u32[144,128]{1,0:T(1,128)}', space=vmem, size = 0x12000, scoped, tag = 'internal scratch']
  %s0 = inlined_call_operand.hbm [shape: bf16[2,16,128], index: 0, kind: input, shape index: {}]
  %s1 = inlined_call_operand.hbm [shape: bf16[128,128], index: 1, kind: input, shape index: {}]
  %s2 = inlined_call_operand.hbm [shape: f32[16,128], index: 2, kind: input, shape index: {}]
  %s3 = inlined_call_operand.hbm [shape: bf16[128,128], index: 3, kind: input, shape index: {}]
  %s4 = inlined_call_operand.vmem [shape: f32[1,128], index: 4, kind: input, shape index: {}]
  %s5 = inlined_call_operand.hbm [shape: f32[2,128], index: 5, kind: output, shape index: {}]
  %s6 = sld [smem:[#allocation0]]
  $region46: #{tpu_custom_call.1} parent=0
    _
  %s8 = ssub.s32 1, %s6
  %s9 = scalar_select 0, %s8, %s6
  $region1: #{tpu_custom_call.1} parent=0
    #allocation2 [shape = 'u8[8192]{0}', space=vmem, size = 0x2000, scoped, tag = 'input window, operand 0, single buffered']
    #allocation3 [shape = 's32[1]{0}', space=sflag, size = 0x4, scoped, tag = 'scoped memory for tpu_custom_call.1']
    #allocation4 [shape = 's32[1]{0}', space=sflag, size = 0x4, scoped, tag = 'scoped memory for tpu_custom_call.1']
    #allocation5 [shape = 'u8[32768]{0}', space=vmem, size = 0x8000, scoped, tag = 'input window, operand 1, single buffered']
    #allocation6 [shape = 's32[1]{0}', space=sflag, size = 0x4, scoped, tag = 'scoped memory for tpu_custom_call.1']
    #allocation7 [shape = 'u8[8192]{0}', space=vmem, size = 0x2000, scoped, tag = 'input window, operand 2, single buffered']
    #allocation8 [shape = 'u8[32768]{0}', space=vmem, size = 0x8000, scoped, tag = 'input window, operand 3, single buffered']
    #allocation9 [shape = 's32[1]{0}', space=sflag, size = 0x4, scoped, tag = 'scoped memory for tpu_custom_call.1']
    #allocation10 [shape = 'u8[1024]{0}', space=vmem, size = 0x400, scoped, tag = 'output window, operand 0, single buffered']
    %10 = vsyncpa [#allocation3], 0
    %11 = vsyncpa [#allocation6], 0
    %12 = vsyncpa [#allocation9], 0
    %13 = vsyncpa [#allocation4], 0
    // Predicated region
    $region2: #{tpu_custom_call.1} parent=1 // pred_check
      _
    $region3: #{tpu_custom_call.1} parent=1 // pred_check_branch
      %15 = sbr.rel (0) target = $region5
    $region4: #{tpu_custom_call.1} parent=1 // pred_region
      %s17 = ssub.s32 256, 256
      %18 = vsyncadd [#allocation3], %s17
      %s19 = sshll.u32 [#allocation2], 4
      %s20 = int_to_ptr.vmem [resolvable:$true] %s19
      %25 = dma.hbm_to_vmem [thread:$0]  %s0, 256, %s20, [#allocation3], 64, 64, 4
    $region5: #{tpu_custom_call.1} parent=1 // pred_fallthru
      _
    // Predicated region
    $region6: #{tpu_custom_call.1} parent=1 // pred_check
      _
    $region7: #{tpu_custom_call.1} parent=1 // pred_check_branch
      %27 = sbr.rel (0) target = $region9
    $region8: #{tpu_custom_call.1} parent=1 // pred_region
      %s29 = ssub.s32 1024, 1024
      %30 = vsyncadd [#allocation6], %s29
      %s31 = sshll.u32 [#allocation5], 4
      %s32 = int_to_ptr.vmem [resolvable:$true] %s31
      %37 = dma.hbm_to_vmem [thread:$0]  %s1, 1024, %s32, [#allocation6], 64, 64, 4
    $region9: #{tpu_custom_call.1} parent=1 // pred_fallthru
      _
    // Predicated region
    $region10: #{tpu_custom_call.1} parent=1 // pred_check
      _
    $region11: #{tpu_custom_call.1} parent=1 // pred_check_branch
      %39 = sbr.rel (0) target = $region13
    $region12: #{tpu_custom_call.1} parent=1 // pred_region
      %s41 = ssub.s32 256, 256
      %42 = vsyncadd [#allocation6], %s41
      %s43 = sshll.u32 [#allocation7], 4
      %s44 = int_to_ptr.vmem [resolvable:$true] %s43
      %49 = dma.hbm_to_vmem [thread:$0]  %s2, 256, %s44, [#allocation6], 128, 128, 8
    $region13: #{tpu_custom_call.1} parent=1 // pred_fallthru
      _
    // Predicated region
    $region14: #{tpu_custom_call.1} parent=1 // pred_check
      _
    $region15: #{tpu_custom_call.1} parent=1 // pred_check_branch
      %51 = sbr.rel (0) target = $region17
    $region16: #{tpu_custom_call.1} parent=1 // pred_region
      %s53 = ssub.s32 1024, 1024
      %54 = vsyncadd [#allocation9], %s53
      %s55 = sshll.u32 [#allocation8], 4
      %s56 = int_to_ptr.vmem [resolvable:$true] %s55
      %61 = dma.hbm_to_vmem [thread:$0]  %s3, 1024, %s56, [#allocation9], 64, 64, 4
    $region17: #{tpu_custom_call.1} parent=1 // pred_fallthru
      _
    // Predicated region
    $region18: #{tpu_custom_call.1} parent=1 // pred_check
      _
    $region19: #{tpu_custom_call.1} parent=1 // pred_check_branch
      %63 = sbr.rel (0) target = $region21
    $region20: #{tpu_custom_call.1} parent=1 // pred_region
      _
    $region21: #{tpu_custom_call.1} parent=1 // pred_fallthru
      _
    // Predicated region
    $region22: #{tpu_custom_call.1} parent=1 // pred_check
      _
    $region23: #{tpu_custom_call.1} parent=1 // pred_check_branch
      %65 = sbr.rel (0) target = $region25
    $region24: #{tpu_custom_call.1} parent=1 // pred_region
      %66 = dma.done [#allocation3], 256
    $region25: #{tpu_custom_call.1} parent=1 // pred_fallthru
      _
    // Predicated region
    $region26: #{tpu_custom_call.1} parent=1 // pred_check
      _
    $region27: #{tpu_custom_call.1} parent=1 // pred_check_branch
      %68 = sbr.rel (0) target = $region29
    $region28: #{tpu_custom_call.1} parent=1 // pred_region
      %69 = dma.done [#allocation6], 1024
    $region29: #{tpu_custom_call.1} parent=1 // pred_fallthru
      _
    // Predicated region
    $region30: #{tpu_custom_call.1} parent=1 // pred_check
      _
    $region31: #{tpu_custom_call.1} parent=1 // pred_check_branch
      %71 = sbr.rel (0) target = $region33
    $region32: #{tpu_custom_call.1} parent=1 // pred_region
      %72 = dma.done [#allocation6], 256
    $region33: #{tpu_custom_call.1} parent=1 // pred_fallthru
      _
    // Predicated region
    $region34: #{tpu_custom_call.1} parent=1 // pred_check
      _
    $region35: #{tpu_custom_call.1} parent=1 // pred_check_branch
      %74 = sbr.rel (0) target = $region37
    $region36: #{tpu_custom_call.1} parent=1 // pred_region
      %75 = dma.done [#allocation9], 1024
    $region37: #{tpu_custom_call.1} parent=1 // pred_fallthru
      _
    %v77 = vld [vmem:[#allocation2] sm:$0xf]
    %v78 = vld [vmem:[#allocation2 + $0x4] sm:$0xf]
    %v79 = vld [vmem:[#allocation2 + $0x8] sm:$0xf]
    %v80 = vld [vmem:[#allocation2 + $0xc] sm:$0xf]
    %v81 = vld [vmem:[#allocation5] sm:$0xf]
    %v82 = vld [vmem:[#allocation5 + $0x4] sm:$0xf]
    %v83 = vld [vmem:[#allocation5 + $0x8] sm:$0xf]
    %v84 = vld [vmem:[#allocation5 + $0xc] sm:$0xf]
    %v85 = vld [vmem:[#allocation5 + $0x10] sm:$0xf]
    %v86 = vld [vmem:[#allocation5 + $0x14] sm:$0xf]
    %v87 = vld [vmem:[#allocation5 + $0x18] sm:$0xf]
    %v88 = vld [vmem:[#allocation5 + $0x1c] sm:$0xf]
    %v89 = vld [vmem:[#allocation5 + $0x20] sm:$0xf]
    %v90 = vld [vmem:[#allocation5 + $0x24] sm:$0xf]
    %v91 = vld [vmem:[#allocation5 + $0x28] sm:$0xf]
    %v92 = vld [vmem:[#allocation5 + $0x2c] sm:$0xf]
    %v93 = vld [vmem:[#allocation5 + $0x30] sm:$0xf]
    %v94 = vld [vmem:[#allocation5 + $0x34] sm:$0xf]
    %v95 = vld [vmem:[#allocation5 + $0x38] sm:$0xf]
    %v96 = vld [vmem:[#allocation5 + $0x3c] sm:$0xf]
    %v101 = vunpack.c.l.b16 %v77
    %v102 = vunpack.c.l.b16 %v78
    %v103 = vunpack.c.l.b16 %v79
    %v104 = vunpack.c.l.b16 %v80
    %v105 = vpack.c.b16 %v102, %v101
    %v106 = vpack.c.b16 %v104, %v103
    %v125 = vunpack.c.l.b16 %v81
    %v126 = vunpack.c.l.b16 %v82
    %v127 = vunpack.c.l.b16 %v83
    %v128 = vunpack.c.l.b16 %v84
    %v129 = vunpack.c.l.b16 %v85
    %v130 = vunpack.c.l.b16 %v86
    %v131 = vunpack.c.l.b16 %v87
    %v132 = vunpack.c.l.b16 %v88
    %v133 = vunpack.c.l.b16 %v89
    %v134 = vunpack.c.l.b16 %v90
    %v135 = vunpack.c.l.b16 %v91
    %v136 = vunpack.c.l.b16 %v92
    %v137 = vunpack.c.l.b16 %v93
    %v138 = vunpack.c.l.b16 %v94
    %v139 = vunpack.c.l.b16 %v95
    %v140 = vunpack.c.l.b16 %v96
    %v141 = vpack.c.b16 %v126, %v125
    %v142 = vpack.c.b16 %v128, %v127
    %v143 = vpack.c.b16 %v130, %v129
    %v144 = vpack.c.b16 %v132, %v131
    %v145 = vpack.c.b16 %v134, %v133
    %v146 = vpack.c.b16 %v136, %v135
    %v147 = vpack.c.b16 %v138, %v137
    %v148 = vpack.c.b16 %v140, %v139
    %157 = vmatprep.subr.bf16.mxu0 0
    %158 = vmatpush1.bf16.msra.mxu0 %v148
    %159 = vmatprep.subr.bf16.mxu0 0
    %160 = vmatpush1.bf16.msra.mxu0 %v147
    %161 = vmatprep.subr.bf16.mxu0 0
    %162 = vmatpush1.bf16.msra.mxu0 %v146
    %163 = vmatprep.subr.bf16.mxu0 0
    %164 = vmatpush1.bf16.msra.mxu0 %v145
    %165 = vmatprep.subr.bf16.mxu0 0
    %166 = vmatpush1.bf16.msra.mxu0 %v144
    %167 = vmatprep.subr.bf16.mxu0 0
    %168 = vmatpush1.bf16.msra.mxu0 %v143
    %169 = vmatprep.subr.bf16.mxu0 0
    %170 = vmatpush1.bf16.msra.mxu0 %v142
    %171 = vmatprep.subr.bf16.mxu0 0
    %172 = vmatpush1.bf16.msra.mxu0 %v141
    %173 = vmatprep.subr.bf16.mxu0 0
    %174 = vmatpush2.bf16.msra.mxu0 0
    %175 = vmatprep.subr.bf16.mxu0 0
    %176 = vmatpush2.bf16.msra.mxu0 0
    %177 = vmatprep.subr.bf16.mxu0 0
    %178 = vmatpush2.bf16.msra.mxu0 0
    %179 = vmatprep.subr.bf16.mxu0 0
    %180 = vmatpush2.bf16.msra.mxu0 0
    %181 = vmatprep.subr.bf16.mxu0 0
    %182 = vmatpush2.bf16.msra.mxu0 0
    %183 = vmatprep.subr.bf16.mxu0 0
    %184 = vmatpush2.bf16.msra.mxu0 0
    %185 = vmatprep.subr.bf16.mxu0 0
    %186 = vmatpush2.bf16.msra.mxu0 0
    %187 = vmatprep.subr.bf16.mxu0 0
    %188 = vmatpush2.bf16.msra.mxu0 0
    %189 = vmatprep.mubr.bf16.mxu0 0
    %190 = vmatmul.mubr.bf16.gmra.mxu0 %v105
    %v191 = vpop.f32.mrf.mxu0
    %v192 = vadd.f32 0.0, %v191
    %v193 = vpop.f32.mrf.mxu0
    %v194 = vpop.f32.mrf.mxu0
    %v195 = vadd.f32 0.0, %v194
    %v196 = vpop.f32.mrf.mxu0
    %197 = vmatprep.mubr.bf16.mxu0 0
    %198 = vmatmul.mubr.bf16.gmra.mxu0 %v106
    %v199 = vpop.f32.mrf.mxu0
    %v200 = vadd.f32 0.0, %v199
    %v201 = vpop.f32.mrf.mxu0
    %v202 = vpop.f32.mrf.mxu0
    %v203 = vadd.f32 0.0, %v202
    %v204 = vpop.f32.mrf.mxu0
    %205 = vdwg.mxu0
    %v206 = vld [vmem:[#allocation7] sm:$0xff]
    %v207 = vld [vmem:[#allocation7 + $0x8] sm:$0xff]
    %v208 = vadd.f32 %v192, %v206
    %v209 = vadd.f32 %v195, %v207
    %v210 = vadd.f32 %v200, %v206
    %v211 = vadd.f32 %v203, %v207
    %v212 = vmax.f32 %v208, 0.0
    %v213 = vmax.f32 %v209, 0.0
    %v214 = vmax.f32 %v210, 0.0
    %v215 = vmax.f32 %v211, 0.0
    %v216 = vmax.f32 %v212, %v213
    %v217 = vrot.slane %v216, 4
    %v218 = vmax.f32 %v216, %v217
    %v219 = vrot.slane %v218, 2
    %v220 = vmax.f32 %v218, %v219
    %v221 = vrot.slane %v220, 1
    %v222 = vmax.f32 %v220, %v221
    %v223 = vmax.f32 %v214, %v215
    %v224 = vrot.slane %v223, 4
    %v225 = vmax.f32 %v223, %v224
    %v226 = vrot.slane %v225, 2
    %v227 = vmax.f32 %v225, %v226
    %v228 = vrot.slane %v227, 1
    %v229 = vmax.f32 %v227, %v228
    %v230 = vpack.c.bf16 %v222, %v222
    %v231 = vpack.c.bf16 %v229, %v229
    %v232 = vld [vmem:[#allocation8] sm:$0xf]
    %v233 = vld [vmem:[#allocation8 + $0x4] sm:$0xf]
    %v234 = vld [vmem:[#allocation8 + $0x8] sm:$0xf]
    %v235 = vld [vmem:[#allocation8 + $0xc] sm:$0xf]
    %v236 = vld [vmem:[#allocation8 + $0x10] sm:$0xf]
    %v237 = vld [vmem:[#allocation8 + $0x14] sm:$0xf]
    %v238 = vld [vmem:[#allocation8 + $0x18] sm:$0xf]
    %v239 = vld [vmem:[#allocation8 + $0x1c] sm:$0xf]
    %v240 = vld [vmem:[#allocation8 + $0x20] sm:$0xf]
    %v241 = vld [vmem:[#allocation8 + $0x24] sm:$0xf]
    %v242 = vld [vmem:[#allocation8 + $0x28] sm:$0xf]
    %v243 = vld [vmem:[#allocation8 + $0x2c] sm:$0xf]
    %v244 = vld [vmem:[#allocation8 + $0x30] sm:$0xf]
    %v245 = vld [vmem:[#allocation8 + $0x34] sm:$0xf]
    %v246 = vld [vmem:[#allocation8 + $0x38] sm:$0xf]
    %v247 = vld [vmem:[#allocation8 + $0x3c] sm:$0xf]
    %v248 = vld [vmem:[%s4] sm:$0x1]
    %v250 = vlaneseq
    %v251 = vshrl.u32 %v250, 7
    %v252 = vsub.s32 0, %v251
    %v253 = vrot.slane %v248, %v252
    %v257 = vunpack.c.l.b16 %v230
    %v258 = vunpack.c.l.b16 %v231
    %vm259 = vcmask 1041409
    %v260 = vsel %vm259, %v258, %v257
    %v261 = vpack.c.b16 %v260, %v260
    %v279 = vunpack.c.l.b16 %v232
    %v280 = vunpack.c.l.b16 %v233
    %v281 = vunpack.c.l.b16 %v234
    %v282 = vunpack.c.l.b16 %v235
    %v283 = vunpack.c.l.b16 %v236
    %v284 = vunpack.c.l.b16 %v237
    %v285 = vunpack.c.l.b16 %v238
    %v286 = vunpack.c.l.b16 %v239
    %v287 = vunpack.c.l.b16 %v240
    %v288 = vunpack.c.l.b16 %v241
    %v289 = vunpack.c.l.b16 %v242
    %v290 = vunpack.c.l.b16 %v243
    %v291 = vunpack.c.l.b16 %v244
    %v292 = vunpack.c.l.b16 %v245
    %v293 = vunpack.c.l.b16 %v246
    %v294 = vunpack.c.l.b16 %v247
    %v295 = vpack.c.b16 %v280, %v279
    %v296 = vpack.c.b16 %v282, %v281
    %v297 = vpack.c.b16 %v284, %v283
    %v298 = vpack.c.b16 %v286, %v285
    %v299 = vpack.c.b16 %v288, %v287
    %v300 = vpack.c.b16 %v290, %v289
    %v301 = vpack.c.b16 %v292, %v291
    %v302 = vpack.c.b16 %v294, %v293
    %311 = vmatprep.subr.bf16.mxu0 0
    %312 = vmatpush1.bf16.msra.mxu0 %v302
    %313 = vmatprep.subr.bf16.mxu0 0
    %314 = vmatpush1.bf16.msra.mxu0 %v301
    %315 = vmatprep.subr.bf16.mxu0 0
    %316 = vmatpush1.bf16.msra.mxu0 %v300
    %317 = vmatprep.subr.bf16.mxu0 0
    %318 = vmatpush1.bf16.msra.mxu0 %v299
    %319 = vmatprep.subr.bf16.mxu0 0
    %320 = vmatpush1.bf16.msra.mxu0 %v298
    %321 = vmatprep.subr.bf16.mxu0 0
    %322 = vmatpush1.bf16.msra.mxu0 %v297
    %323 = vmatprep.subr.bf16.mxu0 0
    %324 = vmatpush1.bf16.msra.mxu0 %v296
    %325 = vmatprep.subr.bf16.mxu0 0
    %326 = vmatpush1.bf16.msra.mxu0 %v295
    %327 = vmatprep.subr.bf16.mxu0 0
    %328 = vmatpush2.bf16.msra.mxu0 0
    %329 = vmatprep.subr.bf16.mxu0 0
    %330 = vmatpush2.bf16.msra.mxu0 0
    %331 = vmatprep.subr.bf16.mxu0 0
    %332 = vmatpush2.bf16.msra.mxu0 0
    %333 = vmatprep.subr.bf16.mxu0 0
    %334 = vmatpush2.bf16.msra.mxu0 0
    %335 = vmatprep.subr.bf16.mxu0 0
    %336 = vmatpush2.bf16.msra.mxu0 0
    %337 = vmatprep.subr.bf16.mxu0 0
    %338 = vmatpush2.bf16.msra.mxu0 0
    %339 = vmatprep.subr.bf16.mxu0 0
    %340 = vmatpush2.bf16.msra.mxu0 0
    %341 = vmatprep.subr.bf16.mxu0 0
    %342 = vmatpush2.bf16.msra.mxu0 0
    %343 = vmatprep.mubr.bf16.mxu0 0
    %344 = vmatmul.mubr.bf16.gmra.mxu0 %v261
    %v345 = vpop.f32.mrf.mxu0
    %v346 = vadd.f32 %v253, %v345
    %v347 = vpop.f32.mrf.mxu0
    %v348 = vpop.f32.mrf.mxu0
    %v349 = vpop.f32.mrf.mxu0
    %350 = vdwg.mxu0
    %351 = vst [vmem:[#allocation10] sm:$0x3] %v346
    // Predicated region
    $region38: #{tpu_custom_call.1} parent=1 // pred_check
      _
    $region39: #{tpu_custom_call.1} parent=1 // pred_check_branch
      %353 = sbr.rel (0) target = $region41
    $region40: #{tpu_custom_call.1} parent=1 // pred_region
      %s355 = ssub.s32 32, 32
      %356 = vsyncadd [#allocation4], %s355
      %s358 = sshll.u32 [#allocation10], 4
      %s359 = int_to_ptr.vmem [resolvable:$true] %s358
      %361 = dma.vmem_to_hbm [thread:$0]  %s359, 32, %s5, [#allocation4]
    $region41: #{tpu_custom_call.1} parent=1 // pred_fallthru
      _
    // Predicated region
    $region42: #{tpu_custom_call.1} parent=1 // pred_check
      _
    $region43: #{tpu_custom_call.1} parent=1 // pred_check_branch
      %363 = sbr.rel (0) target = $region45
    $region44: #{tpu_custom_call.1} parent=1 // pred_region
      %364 = dma.done [#allocation4], 32
    $region45: #{tpu_custom_call.1} parent=1 // pred_fallthru
      _
    %365 = vsyncpa [#allocation3], 1
    %366 = vsyncpa [#allocation6], 1
    %367 = vsyncpa [#allocation9], 1
    %368 = vsyncpa [#allocation4], 1

</llo_original>
